<compile_context>
chip_gen: v7x
topology: tpu7x:2x2x1
jax: 0.10.0
libtpu: 0.0.40
codegen_flags: <defaults>
</compile_context>

<pallas_src>
import jax
import jax.numpy as jnp
from jax.experimental import pallas as pl
from jax.experimental.pallas import tpu as pltpu


def _conv_bn_relu_kernel(p_ref, w_ref, bias_ref, o_ref):
    # p_ref:    [Kp, TILE_M]   bf16 im2col patch tile (K = Cin*7*7, zero-padded)
    # w_ref:    [Cout, Kp]     bf16 BN-scaled conv weights (resident across the grid)
    # bias_ref: [Cout, 1]      f32 fused bias ((conv_b - mean) * scale + beta)
    # o_ref:    [Cout, TILE_M] lane-dense output tile (NCHW order)
    acc = jnp.dot(w_ref[...], p_ref[...], preferred_element_type=jnp.float32)  # MXU
    y = acc + bias_ref[...]                                                    # f32 VPU
    o_ref[...] = jnp.maximum(y, 0.0).astype(o_ref.dtype)                       # ReLU


def _round_up(a, m):
    return (a + m - 1) // m * m


def conv1_forward(x, w, b, gamma, beta, running_mean, running_var, eps=1e-5,
                  stride=2, pad=3, tile_m=1024, out_dtype=jnp.float32):
    """x: [N, C_in, H, W] (NCHW, like PyTorch). Returns [N, 64, Ho, Wo]."""
    N, Cin, H, W = x.shape
    Cout, _, KH, KW = w.shape
    Ho = (H + 2 * pad - KH) // stride + 1
    Wo = (W + 2 * pad - KW) // stride + 1
    M = Ho * Wo                      # spatial positions per batch element
    K = Cin * KH * KW                # contraction length

    # Tile / padding sizes (lane-dense: multiples of 128). Tiles stay tiny relative to
    # VMEM (bf16 [Kp, TILE_M] + f32 [Cout, TILE_M], double-buffered), well under the
    # 32 MiB default scoped VMEM even on v7x's 64 MiB.
    TILE_M = min(int(tile_m), _round_up(M, 128))
    Mp = _round_up(M, TILE_M)
    Kp = _round_up(K, 128)

    # ---- plain-JAX glue: im2col in [N, K, M] layout (K ordered cin-major, kh, kw) ----
    x_pad = jnp.pad(x, ((0, 0), (0, 0), (pad, pad), (pad, pad)))
    taps = []
    for kh in range(KH):
        for kw in range(KW):
            taps.append(x_pad[:, :, kh:kh + stride * Ho:stride,
                                    kw:kw + stride * Wo:stride])   # [N, Cin, Ho, Wo]
    patches = jnp.stack(taps, axis=2)                 # [N, Cin, KH*KW, Ho, Wo]
    patches = patches.reshape(N, K, M)                # matches w.reshape(Cout, K) order
    patches = jnp.pad(patches, ((0, 0), (0, Kp - K), (0, Mp - M)))
    patches = patches.astype(jnp.bfloat16)

    # ---- fold conv bias + BN (inference) into the weights / a single bias ----
    scale = (gamma / jnp.sqrt(running_var + eps)).astype(jnp.float32)        # [Cout]
    bias = ((b - running_mean) * scale + beta).astype(jnp.float32)           # [Cout]
    w_scaled = w.reshape(Cout, K).astype(jnp.float32) * scale[:, None]       # [Cout, K]
    w_scaled = jnp.pad(w_scaled, ((0, 0), (0, Kp - K))).astype(jnp.bfloat16)
    bias2 = bias.reshape(Cout, 1)

    # ---- Pallas kernel: (BN-scaled) matmul + bias + ReLU, tiled over (N, M) ----
    grid = (N, Mp // TILE_M)
    out = pl.pallas_call(
        _conv_bn_relu_kernel,
        out_shape=jax.ShapeDtypeStruct((N, Cout, Mp), out_dtype),
        grid=grid,
        in_specs=[
            pl.BlockSpec((None, Kp, TILE_M), lambda n, m: (n, 0, m)),   # patch tile
            pl.BlockSpec((Cout, Kp), lambda n, m: (0, 0)),              # weights (resident)
            pl.BlockSpec((Cout, 1), lambda n, m: (0, 0)),               # bias (resident)
        ],
        out_specs=pl.BlockSpec((None, Cout, TILE_M), lambda n, m: (n, 0, m)),
        compiler_params=pltpu.CompilerParams(
            dimension_semantics=("parallel", "parallel")),
    )(patches, w_scaled, bias2)

    # already in NCHW order: just drop M padding and reshape (no transpose)
    return out[:, :, :M].reshape(N, Cout, Ho, Wo)


def _reference_f32(x, w, b, gamma, beta, running_mean, running_var, eps=1e-5):
    y = jax.lax.conv_general_dilated(
        x.astype(jnp.float32), w.astype(jnp.float32),
        window_strides=(2, 2), padding=((3, 3), (3, 3)),
        dimension_numbers=("NCHW", "OIHW", "NCHW"))
    y = y + b[None, :, None, None]
    y = (y - running_mean[None, :, None, None]) / jnp.sqrt(
        running_var + eps)[None, :, None, None]
    y = y * gamma[None, :, None, None] + beta[None, :, None, None]
    return jnp.maximum(y, 0.0)


def _reference_bf16(x, w, b, gamma, beta, running_mean, running_var, eps=1e-5):
    # Same bf16 operand rounding as the kernel (scale folded into weights), f32 acc.
    Cout = w.shape[0]
    scale = gamma / jnp.sqrt(running_var + eps)
    bias = (b - running_mean) * scale + beta
    w_s = (w.reshape(Cout, -1).astype(jnp.float32) * scale[:, None]
           ).reshape(w.shape).astype(jnp.bfloat16)
    y = jax.lax.conv_general_dilated(
        x.astype(jnp.bfloat16), w_s,
        window_strides=(2, 2), padding=((3, 3), (3, 3)),
        dimension_numbers=("NCHW", "OIHW", "NCHW"),
        preferred_element_type=jnp.float32)
    y = y + bias[None, :, None, None]
    return jnp.maximum(y, 0.0)


if __name__ == "__main__":
    key = jax.random.PRNGKey(0)
    N, Cin, H, W = 2, 4, 16, 16
    Cout, KH, KW = 64, 7, 7

    k_x, k_w, k_b, k_g, k_be, k_m, k_v = jax.random.split(key, 7)
    x = jax.random.normal(k_x, (N, Cin, H, W), dtype=jnp.float32)

    # Deterministic synthetic parameters (shapes per nn.Conv2d / nn.BatchNorm2d).
    fan_in = Cin * KH * KW
    w = jax.random.normal(k_w, (Cout, Cin, KH, KW), dtype=jnp.float32) / jnp.sqrt(fan_in)
    b = 0.1 * jax.random.normal(k_b, (Cout,), dtype=jnp.float32)
    gamma = 1.0 + 0.1 * jax.random.normal(k_g, (Cout,), dtype=jnp.float32)
    beta = 0.1 * jax.random.normal(k_be, (Cout,), dtype=jnp.float32)
    running_mean = 0.1 * jax.random.normal(k_m, (Cout,), dtype=jnp.float32)
    running_var = 1.0 + 0.1 * jax.random.uniform(k_v, (Cout,), dtype=jnp.float32)

    out = conv1_forward(x, w, b, gamma, beta, running_mean, running_var)
    out = jax.block_until_ready(out)
    assert out.shape == (N, Cout, H // 2, W // 2), out.shape

    # Tight check vs. a reference using the same bf16 operand rounding.
    ref_bf16 = _reference_bf16(x, w, b, gamma, beta, running_mean, running_var)
    err_b = float(jnp.max(jnp.abs(out - ref_bf16)))
    assert jnp.allclose(out, ref_bf16, atol=5e-3, rtol=5e-3), err_b

    # Looser sanity check vs. the exact f32 PyTorch-semantics reference.
    ref_f32 = _reference_f32(x, w, b, gamma, beta, running_mean, running_var)
    err_f = float(jnp.max(jnp.abs(out - ref_f32)))
    assert jnp.allclose(out, ref_f32, atol=5e-2, rtol=5e-2), err_f

    print("KERNEL_OK")
</pallas_src>

<mosaic_0001>
module attributes {stable_mosaic.version = 11 : i64} {
  func.func @_conv_bn_relu_kernel(%arg0: i32, %arg1: i32, %arg2: memref<1x256x128xbf16, #tpu.memory_space<vmem>>, %arg3: memref<64x256xbf16, #tpu.memory_space<vmem>>, %arg4: memref<64x1xf32, #tpu.memory_space<vmem>>, %arg5: memref<1x64x128xf32, #tpu.memory_space<vmem>>) attributes {dimension_semantics = [#tpu.dimension_semantics<parallel>, #tpu.dimension_semantics<parallel>], iteration_bounds = array<i64: 2, 1>, scalar_prefetch = 0 : i64, scratch_operands = 0 : i64, tpu.core_type = #tpu.core_type<tc>, window_params = [{transform_indices = @transform_0, window_bounds = array<i64: 1, 256, 128>}, {pipeline_mode = #tpu.pipeline_mode<synchronous>, transform_indices = @transform_1, window_bounds = array<i64: 64, 256>}, {pipeline_mode = #tpu.pipeline_mode<synchronous>, transform_indices = @transform_2, window_bounds = array<i64: 64, 1>}, {transform_indices = @transform_3, window_bounds = array<i64: 1, 64, 128>}]} {
    %c0 = arith.constant 0 : index
    %c0_0 = arith.constant 0 : index
    %0 = vector.load %arg3[%c0, %c0_0] : memref<64x256xbf16, #tpu.memory_space<vmem>>, vector<64x256xbf16>
    %c0_1 = arith.constant 0 : index
    %c0_2 = arith.constant 0 : index
    %c0_3 = arith.constant 0 : index
    %1 = vector.load %arg2[%c0_1, %c0_2, %c0_3] : memref<1x256x128xbf16, #tpu.memory_space<vmem>>, vector<1x256x128xbf16>
    %2 = vector.shape_cast %1 : vector<1x256x128xbf16> to vector<256x128xbf16>
    %cst = arith.constant dense<0.000000e+00> : vector<64x128xf32>
    %3 = tpu.matmul %0, %2, %cst {dimension_numbers = #tpu.dot_dimension_numbers<[1], [0], [0], [1], [0, 0, 1, 1], [], []>} : vector<64x256xbf16>, vector<256x128xbf16>, vector<64x128xf32> -> vector<64x128xf32>
    %c0_4 = arith.constant 0 : index
    %c0_5 = arith.constant 0 : index
    %4 = vector.load %arg4[%c0_4, %c0_5] : memref<64x1xf32, #tpu.memory_space<vmem>>, vector<64x1xf32>
    %5 = vector.broadcast %4 : vector<64x1xf32> to vector<64x128xf32>
    %6 = arith.addf %3, %5 : vector<64x128xf32>
    %cst_6 = arith.constant 0.000000e+00 : f32
    %7 = vector.broadcast %cst_6 : f32 to vector<64x128xf32>
    %8 = arith.maximumf %6, %7 : vector<64x128xf32>
    %c0_7 = arith.constant 0 : index
    %c0_8 = arith.constant 0 : index
    %c0_9 = arith.constant 0 : index
    %9 = vector.load %arg5[%c0_7, %c0_8, %c0_9] : memref<1x64x128xf32, #tpu.memory_space<vmem>>, vector<1x64x128xf32>
    %10 = vector.shape_cast %9 : vector<1x64x128xf32> to vector<64x128xf32>
    %11 = vector.shape_cast %8 : vector<64x128xf32> to vector<1x64x128xf32>
    tpu.vector_store %arg5[%c0_7, %c0_8, %c0_9], %11 {strides = array<i32>} : memref<1x64x128xf32, #tpu.memory_space<vmem>>, vector<1x64x128xf32>,
    return
  }
  func.func @transform_0(%arg0: i32, %arg1: i32) -> (i32, i32, i32) {
    %c0_i32 = arith.constant 0 : i32
    %c0_i32_0 = arith.constant 0 : i32
    return %arg0, %c0_i32, %arg1 : i32, i32, i32
  }
  func.func @transform_1(%arg0: i32, %arg1: i32) -> (i32, i32) {
    %c0_i32 = arith.constant 0 : i32
    %c0_i32_0 = arith.constant 0 : i32
    %c0_i32_1 = arith.constant 0 : i32
    return %c0_i32, %c0_i32_0 : i32, i32
  }
  func.func @transform_2(%arg0: i32, %arg1: i32) -> (i32, i32) {
    %c0_i32 = arith.constant 0 : i32
    %c0_i32_0 = arith.constant 0 : i32
    %c0_i32_1 = arith.constant 0 : i32
    return %c0_i32, %c0_i32_0 : i32, i32
  }
  func.func @transform_3(%arg0: i32, %arg1: i32) -> (i32, i32, i32) {
    %c0_i32 = arith.constant 0 : i32
    %c0_i32_0 = arith.constant 0 : i32
    return %arg0, %c0_i32, %arg1 : i32, i32, i32
  }
}

</mosaic_0001>

<llo_original>
// kernel: tpu_custom_call.1
$region0: #{tpu_custom_call.1}
  #allocation0 [shape = 'u32[]', space=smem, size = 0x4, offset = 0x4, fixed_abs, tag = 'smem constant byte address 0x4 - core index']
  #allocation1 [shape = 'u32[144,128]{1,0:T(1,128)}', space=vmem, size = 0x12000, scoped, tag = 'internal scratch']
  %s0 = inlined_call_operand.hbm [shape: bf16[2,256,128], index: 0, kind: input, shape index: {}]
  %s1 = inlined_call_operand.vmem [shape: bf16[64,256], index: 1, kind: input, shape index: {}]
  %s2 = inlined_call_operand.vmem [shape: f32[64,1], index: 2, kind: input, shape index: {}]
  %s3 = inlined_call_operand.hbm [shape: f32[2,64,128], index: 3, kind: output, shape index: {}]
  %s4 = sld [smem:[#allocation0]]
  $region49: #{tpu_custom_call.1} parent=0
    _
  %s6 = ssub.s32 1, %s4
  %s7 = scalar_select 0, %s6, %s4
  $region1: #{tpu_custom_call.1} parent=0
    #allocation2 [shape = 'u8[131072]{0}', space=vmem, size = 0x20000, scoped, tag = 'input window, operand 0']
    #allocation3 [shape = 's32[2]{0}', space=sflag, size = 0x8, scoped, tag = 'scoped memory for tpu_custom_call.1']
    #allocation4 [shape = 's32[2]{0}', space=sflag, size = 0x8, scoped, tag = 'scoped memory for tpu_custom_call.1']
    #allocation5 [shape = 'u8[65536]{0}', space=vmem, size = 0x10000, scoped, tag = 'output window, operand 0']
    %8 = vsyncpa [#allocation3], 0
    %s9 = scalar_lea.sflag [#allocation3], 1
    %10 = vsyncpa %s9, 0
    %11 = vsyncpa [#allocation4], 0
    %s12 = scalar_lea.sflag [#allocation4], 1
    %13 = vsyncpa %s12, 0
    loop: start=0, step=1, limit=4
    $region2: #{tpu_custom_call.1} parent=1 // loop_pre_header
      _
    $region3: #{tpu_custom_call.1} parent=1 // loop_header
      %s15 = sphi 0, %s19
      %p16 = scmp.ge.s32.totalorder %s15, 4
      %s22 = sphi 0, %s34
      %s23 = sphi 0, %s30
      %s24 = sphi 0, %s22
      %s25 = sphi 0, %s23
      %s26 = sphi 0, %s24
      %s27 = sphi 0, %s25
      %s39 = sphi 0, %s41
      %s42 = sphi 0, %s39
      %s43 = sphi 0, %s42
      %s59 = sphi 0, %s43
      %s63 = sphi 0, %s63
      %s65 = sphi 0, %s63
      %s66 = sphi 0, %s65
      %s80 = sphi 0, %s66
      %s84 = sphi 0, %s84
      %s86 = sphi 0, %s84
      %s87 = sphi 0, %s86
      %s101 = sphi 0, %s87
      %s109 = sphi 0, %s111
      %s112 = sphi 0, %s109
      %s113 = sphi 0, %s112
      %s129 = sphi 0, %s113
    $region4: #{tpu_custom_call.1} parent=1 // loop_header_branch
      %18 = sbr.rel (%p16) target = $region8
    $region5: #{tpu_custom_call.1} parent=1 // loop_body
      %s20 = ssub.s32 %s15, 1
      %s21 = ssub.s32 %s15, 2
      %s28 = sadd.s32 1, %s23
      %p29 = scmp.ge.s32.totalorder %s28, 1
      %s30 = scalar_select %p29, 0, %s28
      %s31 = sadd.s32 1, %s22
      %s32 = scalar_select %p29, %s31, %s22
      %p33 = scmp.ge.s32.totalorder %s32, 2
      %s34 = scalar_select %p33, 0, %s32
      %s35 = ssub.s32 %s22, %s34
      %s36 = ssub.s32 %s23, %s30
      %s37 = sor.u32 %s35, %s36
      %p38 = scmp.eq.s32.totalorder %s37, 0
      %s40 = sadd.s32 %s39, 1
      %s41 = scalar_select %p38, %s39, %s40
      %p44 = pneg %p38
      %p45 = scmp.eq.s32.totalorder %s15, 1
      %p46 = por %p44, %p45
      %p47 = scmp.ne.s32.totalorder %s39, %s42
      %p48 = scmp.eq.s32.totalorder %s15, 0
      %p49 = por %p47, %p48
      %p50 = scmp.ne.s32.totalorder %s39, %s42
      %p51 = scmp.eq.s32.totalorder %s20, 1
      %p52 = por %p50, %p51
      %p53 = scmp.ne.s32.totalorder %s42, %s43
      %p54 = scmp.eq.s32.totalorder %s20, 0
      %p55 = por %p53, %p54
      %p56 = scmp.ne.s32.totalorder %s42, %s43
      %p57 = scmp.eq.s32.totalorder %s21, 1
      %p58 = por %p56, %p57
      %p60 = scmp.ne.s32.totalorder %s43, %s59
      %p61 = scmp.eq.s32.totalorder %s21, 0
      %p62 = por %p60, %p61
      %s64 = sadd.s32 %s63, 1
      %p67 = scmp.eq.s32.totalorder %s15, 1
      %p68 = scmp.ne.s32.totalorder %s63, %s65
      %p69 = scmp.eq.s32.totalorder %s15, 0
      %p70 = por %p68, %p69
      %p71 = scmp.ne.s32.totalorder %s63, %s65
      %p72 = scmp.eq.s32.totalorder %s20, 1
      %p73 = por %p71, %p72
      %p74 = scmp.ne.s32.totalorder %s65, %s66
      %p75 = scmp.eq.s32.totalorder %s20, 0
      %p76 = por %p74, %p75
      %p77 = scmp.ne.s32.totalorder %s65, %s66
      %p78 = scmp.eq.s32.totalorder %s21, 1
      %p79 = por %p77, %p78
      %p81 = scmp.ne.s32.totalorder %s66, %s80
      %p82 = scmp.eq.s32.totalorder %s21, 0
      %p83 = por %p81, %p82
      %s85 = sadd.s32 %s84, 1
      %p88 = scmp.eq.s32.totalorder %s15, 1
      %p89 = scmp.ne.s32.totalorder %s84, %s86
      %p90 = scmp.eq.s32.totalorder %s15, 0
      %p91 = por %p89, %p90
      %p92 = scmp.ne.s32.totalorder %s84, %s86
      %p93 = scmp.eq.s32.totalorder %s20, 1
      %p94 = por %p92, %p93
      %p95 = scmp.ne.s32.totalorder %s86, %s87
      %p96 = scmp.eq.s32.totalorder %s20, 0
      %p97 = por %p95, %p96
      %p98 = scmp.ne.s32.totalorder %s86, %s87
      %p99 = scmp.eq.s32.totalorder %s21, 1
      %p100 = por %p98, %p99
      %p102 = scmp.ne.s32.totalorder %s87, %s101
      %p103 = scmp.eq.s32.totalorder %s21, 0
      %p104 = por %p102, %p103
      %s105 = ssub.s32 %s22, %s34
      %s106 = ssub.s32 %s23, %s30
      %s107 = sor.u32 %s105, %s106
      %p108 = scmp.eq.s32.totalorder %s107, 0
      %s110 = sadd.s32 %s109, 1
      %s111 = scalar_select %p108, %s109, %s110
      %p114 = pneg %p108
      %p115 = scmp.eq.s32.totalorder %s15, 1
      %p116 = por %p114, %p115
      %p117 = scmp.ne.s32.totalorder %s109, %s112
      %p118 = scmp.eq.s32.totalorder %s15, 0
      %p119 = por %p117, %p118
      %p120 = scmp.ne.s32.totalorder %s109, %s112
      %p121 = scmp.eq.s32.totalorder %s20, 1
      %p122 = por %p120, %p121
      %p123 = scmp.ne.s32.totalorder %s112, %s113
      %p124 = scmp.eq.s32.totalorder %s20, 0
      %p125 = por %p123, %p124
      %p126 = scmp.ne.s32.totalorder %s112, %s113
      %p127 = scmp.eq.s32.totalorder %s21, 1
      %p128 = por %p126, %p127
      %p130 = scmp.ne.s32.totalorder %s113, %s129
      %p131 = scmp.eq.s32.totalorder %s21, 0
      %p132 = por %p130, %p131
      %p133 = scmp.le.s32.totalorder 1, %s15
      %p134 = scmp.lt.s32.totalorder %s15, 3
      %p135 = pnand %p133, %p134
      %p136 = pneg %p135
      // Predicated region
      $region9: #{tpu_custom_call.1} parent=5 // pred_check
        _
      $region10: #{tpu_custom_call.1} parent=5 // pred_check_branch
        %138 = sbr.rel (%p135) target = $region12
      $region11: #{tpu_custom_call.1} parent=5 // pred_region
        %s139 = ssub.s32 %s15, 1
        // Predicated region
        $region13: #{tpu_custom_call.1} parent=11 // pred_check
          %p140 = pneg %p76
        $region14: #{tpu_custom_call.1} parent=11 // pred_check_branch
          %142 = sbr.rel (%p140) target = $region16
        $region15: #{tpu_custom_call.1} parent=11 // pred_region
          _
        $region16: #{tpu_custom_call.1} parent=11 // pred_fallthru
          _
        // Predicated region
        $region17: #{tpu_custom_call.1} parent=11 // pred_check
          %p143 = pneg %p97
        $region18: #{tpu_custom_call.1} parent=11 // pred_check_branch
          %145 = sbr.rel (%p143) target = $region20
        $region19: #{tpu_custom_call.1} parent=11 // pred_region
          _
        $region20: #{tpu_custom_call.1} parent=11 // pred_fallthru
          _
      $region12: #{tpu_custom_call.1} parent=5 // pred_fallthru
        _
      %p146 = scmp.lt.s32.totalorder %s15, 2
      // Predicated region
      $region21: #{tpu_custom_call.1} parent=5 // pred_check
        %p147 = pneg %p146
      $region22: #{tpu_custom_call.1} parent=5 // pred_check_branch
        %149 = sbr.rel (%p147) target = $region24
      $region23: #{tpu_custom_call.1} parent=5 // pred_region
        // Predicated region
        $region25: #{tpu_custom_call.1} parent=23 // pred_check
          %p150 = pneg %p49
        $region26: #{tpu_custom_call.1} parent=23 // pred_check_branch
          %152 = sbr.rel (%p150) target = $region28
        $region27: #{tpu_custom_call.1} parent=23 // pred_region
          %s153 = sand.u32 %s39, 1
          %s154 = scalar_lea.sflag [#allocation3], %s153
          %s155 = sand.u32 %s39, 1
          %s156 = smul.addr %s155, 128
          %s157 = scalar_lea.vmem [#allocation2], %s156
          %s159 = ssub.s32 2048, 2048
          %160 = vsyncadd %s154, %s159
          %s161 = smul.addr %s22, 32
          %s162 = sadd.s32 %s23, %s161
          %s163 = smul.addr %s162, 64
          %s164 = scalar_lea.hbm %s0, %s163
          %s165 = sshll.u32 %s157, 4
          %s166 = int_to_ptr.vmem [resolvable:$true] %s165
          %171 = dma.hbm_to_vmem [thread:$0]  %s164, 2048, %s166, %s154, 64, 64, 4
        $region28: #{tpu_custom_call.1} parent=23 // pred_fallthru
          _
      $region24: #{tpu_custom_call.1} parent=5 // pred_fallthru
        _
      %p172 = scmp.le.s32.totalorder 1, %s15
      %p173 = scmp.lt.s32.totalorder %s15, 3
      %p174 = pnand %p172, %p173
      %p175 = pneg %p174
      // Predicated region
      $region29: #{tpu_custom_call.1} parent=5 // pred_check
        _
      $region30: #{tpu_custom_call.1} parent=5 // pred_check_branch
        %177 = sbr.rel (%p174) target = $region32
      $region31: #{tpu_custom_call.1} parent=5 // pred_region
        %s178 = ssub.s32 %s15, 1
        %s179 = sand.u32 %s42, 1
        %s180 = scalar_lea.sflag [#allocation3], %s179
        %s181 = sand.u32 %s42, 1
        %s182 = smul.addr %s181, 128
        %s183 = scalar_lea.vmem [#allocation2], %s182
        // Predicated region
        $region33: #{tpu_custom_call.1} parent=31 // pred_check
          %p184 = pneg %p55
        $region34: #{tpu_custom_call.1} parent=31 // pred_check_branch
          %186 = sbr.rel (%p184) target = $region36
        $region35: #{tpu_custom_call.1} parent=31 // pred_region
          %187 = dma.done %s180, 2048
        $region36: #{tpu_custom_call.1} parent=31 // pred_fallthru
          _
        %s188 = sand.u32 %s42, 1
        %s189 = scalar_lea.sflag [#allocation3], %s188
        %s190 = sand.u32 %s42, 1
        %s191 = smul.addr %s190, 128
        %s192 = scalar_lea.vmem [#allocation2], %s191
        %p193 = pneg %p55
        %p194 = pneg %p52
        %p195 = pneg %p76
        %p196 = pneg %p73
        %p197 = pneg %p97
        %p198 = pneg %p94
        %p199 = pneg %p125
        %p200 = pneg %p122
        %s201 = sand.u32 %s112, 1
        %s202 = scalar_lea.sflag [#allocation4], %s201
        %s203 = sand.u32 %s112, 1
        %s204 = smul.addr %s203, 64
        %s205 = scalar_lea.vmem [#allocation5], %s204
        %v207 = vld [vmem:[%s1] sm:$0xff]
        %v208 = vld [vmem:[%s1 + $0x8] sm:$0xff]
        %v209 = vld [vmem:[%s1 + $0x10] sm:$0xff]
        %v210 = vld [vmem:[%s1 + $0x18] sm:$0xff]
        %v211 = vld [vmem:[%s1 + $0x20] sm:$0xff]
        %v212 = vld [vmem:[%s1 + $0x28] sm:$0xff]
        %v213 = vld [vmem:[%s1 + $0x30] sm:$0xff]
        %v214 = vld [vmem:[%s1 + $0x38] sm:$0xff]
        %v215 = vld [vmem:[%s183] sm:$0xf]
        %v216 = vld [vmem:[%s183 + $0x4] sm:$0xf]
        %v217 = vld [vmem:[%s183 + $0x8] sm:$0xf]
        %v218 = vld [vmem:[%s183 + $0xc] sm:$0xf]
        %v219 = vld [vmem:[%s183 + $0x10] sm:$0xf]
        %v220 = vld [vmem:[%s183 + $0x14] sm:$0xf]
        %v221 = vld [vmem:[%s183 + $0x18] sm:$0xf]
        %v222 = vld [vmem:[%s183 + $0x1c] sm:$0xf]
        %v223 = vld [vmem:[%s183 + $0x20] sm:$0xf]
        %v224 = vld [vmem:[%s183 + $0x24] sm:$0xf]
        %v225 = vld [vmem:[%s183 + $0x28] sm:$0xf]
        %v226 = vld [vmem:[%s183 + $0x2c] sm:$0xf]
        %v227 = vld [vmem:[%s183 + $0x30] sm:$0xf]
        %v228 = vld [vmem:[%s183 + $0x34] sm:$0xf]
        %v229 = vld [vmem:[%s183 + $0x38] sm:$0xf]
        %v230 = vld [vmem:[%s183 + $0x3c] sm:$0xf]
        %v231 = vld [vmem:[%s183 + $0x40] sm:$0xf]
        %v232 = vld [vmem:[%s183 + $0x44] sm:$0xf]
        %v233 = vld [vmem:[%s183 + $0x48] sm:$0xf]
        %v234 = vld [vmem:[%s183 + $0x4c] sm:$0xf]
        %v235 = vld [vmem:[%s183 + $0x50] sm:$0xf]
        %v236 = vld [vmem:[%s183 + $0x54] sm:$0xf]
        %v237 = vld [vmem:[%s183 + $0x58] sm:$0xf]
        %v238 = vld [vmem:[%s183 + $0x5c] sm:$0xf]
        %v239 = vld [vmem:[%s183 + $0x60] sm:$0xf]
        %v240 = vld [vmem:[%s183 + $0x64] sm:$0xf]
        %v241 = vld [vmem:[%s183 + $0x68] sm:$0xf]
        %v242 = vld [vmem:[%s183 + $0x6c] sm:$0xf]
        %v243 = vld [vmem:[%s183 + $0x70] sm:$0xf]
        %v244 = vld [vmem:[%s183 + $0x74] sm:$0xf]
        %v245 = vld [vmem:[%s183 + $0x78] sm:$0xf]
        %v246 = vld [vmem:[%s183 + $0x7c] sm:$0xf]
        %v247 = vld [vmem:[%s2] sm:$0xff]
        %v248 = vld [vmem:[%s2 + $0x8] sm:$0xff]
        %v249 = vld [vmem:[%s2 + $0x10] sm:$0xff]
        %v250 = vld [vmem:[%s2 + $0x18] sm:$0xff]
        %v251 = vld [vmem:[%s2 + $0x20] sm:$0xff]
        %v252 = vld [vmem:[%s2 + $0x28] sm:$0xff]
        %v253 = vld [vmem:[%s2 + $0x30] sm:$0xff]
        %v254 = vld [vmem:[%s2 + $0x38] sm:$0xff]
        %256 = vset.pattern.permute.xlu0 0
        %257 = vperm.xlu0 %256, %v247
        %v258 = vpop.permute.xlu0 %257
        %261 = vset.pattern.permute.xlu0 0
        %262 = vperm.xlu0 %261, %v248
        %v263 = vpop.permute.xlu0 %262
        %266 = vset.pattern.permute.xlu0 0
        %267 = vperm.xlu0 %266, %v249
        %v268 = vpop.permute.xlu0 %267
        %271 = vset.pattern.permute.xlu0 0
        %272 = vperm.xlu0 %271, %v250
        %v273 = vpop.permute.xlu0 %272
        %276 = vset.pattern.permute.xlu0 0
        %277 = vperm.xlu0 %276, %v251
        %v278 = vpop.permute.xlu0 %277
        %281 = vset.pattern.permute.xlu0 0
        %282 = vperm.xlu0 %281, %v252
        %v283 = vpop.permute.xlu0 %282
        %286 = vset.pattern.permute.xlu0 0
        %287 = vperm.xlu0 %286, %v253
        %v288 = vpop.permute.xlu0 %287
        %291 = vset.pattern.permute.xlu0 0
        %292 = vperm.xlu0 %291, %v254
        %v293 = vpop.permute.xlu0 %292
        %v303 = vunpack.c.l.b16 %v207
        %v304 = vunpack.c.h.b16 %v207
        %v305 = vunpack.c.l.b16 %v208
        %v306 = vunpack.c.h.b16 %v208
        %v307 = vunpack.c.l.b16 %v209
        %v308 = vunpack.c.h.b16 %v209
        %v309 = vunpack.c.l.b16 %v210
        %v310 = vunpack.c.h.b16 %v210
        %v311 = vunpack.c.l.b16 %v211
        %v312 = vunpack.c.h.b16 %v211
        %v313 = vunpack.c.l.b16 %v212
        %v314 = vunpack.c.h.b16 %v212
        %v315 = vunpack.c.l.b16 %v213
        %v316 = vunpack.c.h.b16 %v213
        %v317 = vunpack.c.l.b16 %v214
        %v318 = vunpack.c.h.b16 %v214
        %v319 = vpack.c.b16 %v305, %v303
        %v320 = vpack.c.b16 %v306, %v304
        %v321 = vpack.c.b16 %v309, %v307
        %v322 = vpack.c.b16 %v310, %v308
        %v323 = vpack.c.b16 %v313, %v311
        %v324 = vpack.c.b16 %v314, %v312
        %v325 = vpack.c.b16 %v317, %v315
        %v326 = vpack.c.b16 %v318, %v316
        %v367 = vunpack.c.l.b16 %v215
        %v368 = vunpack.c.l.b16 %v216
        %v369 = vunpack.c.l.b16 %v217
        %v370 = vunpack.c.l.b16 %v218
        %v371 = vunpack.c.l.b16 %v219
        %v372 = vunpack.c.l.b16 %v220
        %v373 = vunpack.c.l.b16 %v221
        %v374 = vunpack.c.l.b16 %v222
        %v375 = vunpack.c.l.b16 %v223
        %v376 = vunpack.c.l.b16 %v224
        %v377 = vunpack.c.l.b16 %v225
        %v378 = vunpack.c.l.b16 %v226
        %v379 = vunpack.c.l.b16 %v227
        %v380 = vunpack.c.l.b16 %v228
        %v381 = vunpack.c.l.b16 %v229
        %v382 = vunpack.c.l.b16 %v230
        %v383 = vunpack.c.l.b16 %v231
        %v384 = vunpack.c.l.b16 %v232
        %v385 = vunpack.c.l.b16 %v233
        %v386 = vunpack.c.l.b16 %v234
        %v387 = vunpack.c.l.b16 %v235
        %v388 = vunpack.c.l.b16 %v236
        %v389 = vunpack.c.l.b16 %v237
        %v390 = vunpack.c.l.b16 %v238
        %v391 = vunpack.c.l.b16 %v239
        %v392 = vunpack.c.l.b16 %v240
        %v393 = vunpack.c.l.b16 %v241
        %v394 = vunpack.c.l.b16 %v242
        %v395 = vunpack.c.l.b16 %v243
        %v396 = vunpack.c.l.b16 %v244
        %v397 = vunpack.c.l.b16 %v245
        %v398 = vunpack.c.l.b16 %v246
        %v399 = vpack.c.b16 %v368, %v367
        %v400 = vpack.c.b16 %v370, %v369
        %v401 = vpack.c.b16 %v372, %v371
        %v402 = vpack.c.b16 %v374, %v373
        %v403 = vpack.c.b16 %v376, %v375
        %v404 = vpack.c.b16 %v378, %v377
        %v405 = vpack.c.b16 %v380, %v379
        %v406 = vpack.c.b16 %v382, %v381
        %v407 = vpack.c.b16 %v384, %v383
        %v408 = vpack.c.b16 %v386, %v385
        %v409 = vpack.c.b16 %v388, %v387
        %v410 = vpack.c.b16 %v390, %v389
        %v411 = vpack.c.b16 %v392, %v391
        %v412 = vpack.c.b16 %v394, %v393
        %v413 = vpack.c.b16 %v396, %v395
        %v414 = vpack.c.b16 %v398, %v397
        %431 = vmatprep.subr.bf16.mxu0 0
        %432 = vmatpush1.bf16.msra.mxu0 %v399
        %433 = vmatprep.subr.bf16.mxu0 0
        %434 = vmatpush1.bf16.msra.mxu0 %v400
        %435 = vmatprep.subr.bf16.mxu0 0
        %436 = vmatpush1.bf16.msra.mxu0 %v401
        %437 = vmatprep.subr.bf16.mxu0 0
        %438 = vmatpush1.bf16.msra.mxu0 %v402
        %439 = vmatprep.subr.bf16.mxu0 0
        %440 = vmatpush1.bf16.msra.mxu0 %v403
        %441 = vmatprep.subr.bf16.mxu0 0
        %442 = vmatpush1.bf16.msra.mxu0 %v404
        %443 = vmatprep.subr.bf16.mxu0 0
        %444 = vmatpush1.bf16.msra.mxu0 %v405
        %445 = vmatprep.subr.bf16.mxu0 0
        %446 = vmatpush1.bf16.msra.mxu0 %v406
        %447 = vmatprep.subr.bf16.mxu0 0
        %448 = vmatpush1.bf16.msra.mxu0 %v407
        %449 = vmatprep.subr.bf16.mxu0 0
        %450 = vmatpush1.bf16.msra.mxu0 %v408
        %451 = vmatprep.subr.bf16.mxu0 0
        %452 = vmatpush1.bf16.msra.mxu0 %v409
        %453 = vmatprep.subr.bf16.mxu0 0
        %454 = vmatpush1.bf16.msra.mxu0 %v410
        %455 = vmatprep.subr.bf16.mxu0 0
        %456 = vmatpush1.bf16.msra.mxu0 %v411
        %457 = vmatprep.subr.bf16.mxu0 0
        %458 = vmatpush1.bf16.msra.mxu0 %v412
        %459 = vmatprep.subr.bf16.mxu0 0
        %460 = vmatpush1.bf16.msra.mxu0 %v413
        %461 = vmatprep.subr.bf16.mxu0 0
        %462 = vmatpush1.bf16.msra.mxu0 %v414
        %463 = vmatprep.mubr.bf16.mxu0 %v320
        %464 = vmatmul.mubr.bf16.gmra.mrb[0].mxu0 %v319
        %v465 = vpop.f32.mrb[0].mxu0
        %v466 = vadd.f32 %v258, %v465
        %v467 = vpop.f32.mrb[0].mxu0
        %v468 = vpop.f32.mrb[0].mxu0
        %v469 = vadd.f32 %v263, %v468
        %v470 = vpop.f32.mrb[0].mxu0
        %471 = vmatprep.mubr.bf16.mxu0 %v322
        %472 = vmatmul.mubr.bf16.gmra.mrb[0].mxu0 %v321
        %v473 = vpop.f32.mrb[0].mxu0
        %v474 = vadd.f32 %v268, %v473
        %v475 = vpop.f32.mrb[0].mxu0
        %v476 = vpop.f32.mrb[0].mxu0
        %v477 = vadd.f32 %v273, %v476
        %v478 = vpop.f32.mrb[0].mxu0
        %479 = vmatprep.mubr.bf16.mxu0 %v324
        %480 = vmatmul.mubr.bf16.gmra.mrb[0].mxu0 %v323
        %v481 = vpop.f32.mrb[0].mxu0
        %v482 = vadd.f32 %v278, %v481
        %v483 = vpop.f32.mrb[0].mxu0
        %v484 = vpop.f32.mrb[0].mxu0
        %v485 = vadd.f32 %v283, %v484
        %v486 = vpop.f32.mrb[0].mxu0
        %487 = vmatprep.mubr.bf16.mxu0 %v326
        %488 = vmatmul.mubr.bf16.gmra.mrb[0].mxu0 %v325
        %v489 = vpop.f32.mrb[0].mxu0
        %v490 = vadd.f32 %v288, %v489
        %v491 = vpop.f32.mrb[0].mxu0
        %v492 = vpop.f32.mrb[0].mxu0
        %v493 = vadd.f32 %v293, %v492
        %v494 = vpop.f32.mrb[0].mxu0
        %495 = vdwg.mxu0
        %v496 = vmax.f32 %v466, 0.0
        %v497 = vmax.f32 %v469, 0.0
        %v498 = vmax.f32 %v474, 0.0
        %v499 = vmax.f32 %v477, 0.0
        %v500 = vmax.f32 %v482, 0.0
        %v501 = vmax.f32 %v485, 0.0
        %v502 = vmax.f32 %v490, 0.0
        %v503 = vmax.f32 %v493, 0.0
        %504 = vst [vmem:[%s205] sm:$0xff] %v496
        %505 = vst [vmem:[%s205 + $0x8] sm:$0xff] %v497
        %506 = vst [vmem:[%s205 + $0x10] sm:$0xff] %v498
        %507 = vst [vmem:[%s205 + $0x18] sm:$0xff] %v499
        %508 = vst [vmem:[%s205 + $0x20] sm:$0xff] %v500
        %509 = vst [vmem:[%s205 + $0x28] sm:$0xff] %v501
        %510 = vst [vmem:[%s205 + $0x30] sm:$0xff] %v502
        %511 = vst [vmem:[%s205 + $0x38] sm:$0xff] %v503
        %s512 = sand.u32 %s112, 1
        %s513 = scalar_lea.sflag [#allocation4], %s512
        %s514 = sand.u32 %s112, 1
        %s515 = smul.addr %s514, 64
        %s516 = scalar_lea.vmem [#allocation5], %s515
        // Predicated region
        $region37: #{tpu_custom_call.1} parent=31 // pred_check
          %p517 = pneg %p122
        $region38: #{tpu_custom_call.1} parent=31 // pred_check_branch
          %519 = sbr.rel (%p517) target = $region40
        $region39: #{tpu_custom_call.1} parent=31 // pred_region
          %s521 = ssub.s32 1024, 1024
          %522 = vsyncadd %s513, %s521
          %s523 = smul.addr %s24, 8
          %s524 = sadd.s32 %s25, %s523
          %s525 = smul.addr %s524, 128
          %s526 = scalar_lea.hbm %s3, %s525
          %s527 = sshll.u32 %s516, 4
          %s528 = int_to_ptr.vmem [resolvable:$true] %s527
          %533 = dma.vmem_to_hbm [thread:$0]  %s528, 1024, %s526, %s513, 128, 128, 8
        $region40: #{tpu_custom_call.1} parent=31 // pred_fallthru
          _
      $region32: #{tpu_custom_call.1} parent=5 // pred_fallthru
        _
      %p534 = scmp.le.s32.totalorder 2, %s15
      // Predicated region
      $region41: #{tpu_custom_call.1} parent=5 // pred_check
        %p535 = pneg %p534
      $region42: #{tpu_custom_call.1} parent=5 // pred_check_branch
        %537 = sbr.rel (%p535) target = $region44
      $region43: #{tpu_custom_call.1} parent=5 // pred_region
        %s538 = ssub.s32 %s15, 2
        // Predicated region
        $region45: #{tpu_custom_call.1} parent=43 // pred_check
          %p539 = pneg %p128
        $region46: #{tpu_custom_call.1} parent=43 // pred_check_branch
          %541 = sbr.rel (%p539) target = $region48
        $region47: #{tpu_custom_call.1} parent=43 // pred_region
          %s542 = sand.u32 %s113, 1
          %s543 = scalar_lea.sflag [#allocation4], %s542
          %s544 = sand.u32 %s113, 1
          %s545 = smul.addr %s544, 64
          %s546 = scalar_lea.vmem [#allocation5], %s545
          %547 = dma.done %s543, 1024
        $region48: #{tpu_custom_call.1} parent=43 // pred_fallthru
          _
      $region44: #{tpu_custom_call.1} parent=5 // pred_fallthru
        _
    $region6: #{tpu_custom_call.1} parent=1 // loop_footer
      %s19 = sadd.s32 1, %s15
    $region7: #{tpu_custom_call.1} parent=1 // loop_footer_branch
      %14 = sbr.rel target = $region3
    $region8: #{tpu_custom_call.1} parent=1 // loop_exit
      _
    %548 = vsyncpa [#allocation3], 1
    %s549 = scalar_lea.sflag [#allocation3], 1
    %550 = vsyncpa %s549, 1
    %551 = vsyncpa [#allocation4], 1
    %s552 = scalar_lea.sflag [#allocation4], 1
    %553 = vsyncpa %s552, 1

</llo_original>
